<compile_context>
chip_gen: v7x
topology: tpu7x:2x2x1
jax: 0.10.0
libtpu: 0.0.40
codegen_flags: <defaults>
</compile_context>

<pallas_src>
import jax
import jax.numpy as jnp
from jax.experimental import pallas as pl
from jax.experimental.pallas import tpu as pltpu

ROWS = 2     # kron(ones(2,1), .) replication factor
FEATS = 56   # linear_weight feature dim


def _generator1_kernel(delta_ref, w_ref, x_ref, xout_ref, wm_ref):
    # delta_ref : SMEM (1,)    f32
    # w_ref     : VMEM (1, 56) f32   linear_weight
    # x_ref     : VMEM (2, 56) f32   x
    # xout_ref  : VMEM (2, 56) f32   kron(ones(2,1), wm) * x
    # wm_ref    : VMEM (1, 56) f32   weight_mapped
    delta = delta_ref[0]
    scale = 2.0 * delta          # (w - 0.5)*2*delta + 1 == w*scale + bias
    bias = 1.0 - delta

    wm = w_ref[...] * scale + bias            # (1, 56), one fused mul-add
    wm_ref[...] = wm                          # single full-block store
    # (2,56) * (1,56) broadcast == kron(ones(2,1), wm) * x
    xout_ref[...] = x_ref[...] * wm           # single full-block store


# Built once at import time; shapes are fixed, delta arrives at runtime.
_generator1_pallas = pl.pallas_call(
    _generator1_kernel,
    out_shape=(
        jax.ShapeDtypeStruct((ROWS, FEATS), jnp.float32),   # x_out
        jax.ShapeDtypeStruct((1, FEATS), jnp.float32),       # weight_mapped
    ),
    in_specs=[
        pl.BlockSpec(memory_space=pltpu.MemorySpace.SMEM),    # delta scalar
        pl.BlockSpec((1, FEATS), lambda: (0, 0)),             # linear_weight
        pl.BlockSpec((ROWS, FEATS), lambda: (0, 0)),          # x
    ],
    out_specs=(
        pl.BlockSpec((ROWS, FEATS), lambda: (0, 0)),          # x_out
        pl.BlockSpec((1, FEATS), lambda: (0, 0)),             # weight_mapped
    ),
)


@jax.jit
def _generator1_jit(x, linear_weight, delta_arr):
    return _generator1_pallas(delta_arr, linear_weight, x)


def generator1_forward(x, linear_weight, delta=0.2):
    """x: (2, 56) f32, linear_weight: (1, 56) f32 -> (x_out (2, 56), weight_mapped (1, 56))."""
    assert x.shape == (ROWS, FEATS), x.shape
    assert linear_weight.shape == (1, FEATS), linear_weight.shape
    delta_arr = jnp.asarray(delta, dtype=jnp.float32).reshape((1,))
    return _generator1_jit(
        x.astype(jnp.float32), linear_weight.astype(jnp.float32), delta_arr
    )


def _reference(x, w, delta=0.2):
    wm = (w - 0.5) * 2.0 * delta + 1.0
    kron = jnp.tile(wm, (ROWS, 1))
    return kron * x, wm


if __name__ == "__main__":
    key = jax.random.PRNGKey(0)
    k_w, k_x = jax.random.split(key)
    # Deterministic "parameter" (stand-in for torch.rand(1, 56)).
    linear_weight = jax.random.uniform(k_w, (1, FEATS), dtype=jnp.float32)
    # kron(ones(2,1), wm) is (2, 56), so x is (2, 56).
    x = jax.random.normal(k_x, (ROWS, FEATS), dtype=jnp.float32)

    x_out, weight_mapped = generator1_forward(x, linear_weight, delta=0.2)
    jax.block_until_ready((x_out, weight_mapped))

    x_ref, wm_ref = _reference(x, linear_weight, delta=0.2)
    assert x_out.shape == (ROWS, FEATS)
    assert weight_mapped.shape == (1, FEATS)
    assert jnp.allclose(x_out, x_ref, atol=1e-6, rtol=1e-6)
    assert jnp.allclose(weight_mapped, wm_ref, atol=1e-6, rtol=1e-6)

    # A different delta must NOT trigger a fresh trace/compile (delta is a
    # runtime SMEM scalar, not a baked constant).
    x_out2, wm2 = generator1_forward(x, linear_weight, delta=0.7)
    jax.block_until_ready((x_out2, wm2))
    x_ref2, wm_ref2 = _reference(x, linear_weight, delta=0.7)
    assert jnp.allclose(x_out2, x_ref2, atol=1e-6, rtol=1e-6)
    assert jnp.allclose(wm2, wm_ref2, atol=1e-6, rtol=1e-6)

    print("KERNEL_OK")
</pallas_src>

<mosaic_0001>
module attributes {stable_mosaic.version = 11 : i64} {
  func.func @_generator1_kernel(%arg0: memref<1xf32, #tpu.memory_space<smem>>, %arg1: memref<1x56xf32, #tpu.memory_space<vmem>>, %arg2: memref<2x56xf32, #tpu.memory_space<vmem>>, %arg3: memref<2x56xf32, #tpu.memory_space<vmem>>, %arg4: memref<1x56xf32, #tpu.memory_space<vmem>>) attributes {dimension_semantics = [], scalar_prefetch = 0 : i64, scratch_operands = 0 : i64, tpu.core_type = #tpu.core_type<tc>} {
    %c0 = arith.constant 0 : index
    %0 = memref.load %arg0[%c0] : memref<1xf32, #tpu.memory_space<smem>>
    %cst = arith.constant 2.000000e+00 : f32
    %1 = arith.mulf %cst, %0 : f32
    %cst_0 = arith.constant 1.000000e+00 : f32
    %2 = arith.subf %cst_0, %0 : f32
    %c0_1 = arith.constant 0 : index
    %c0_2 = arith.constant 0 : index
    %3 = vector.load %arg1[%c0_1, %c0_2] : memref<1x56xf32, #tpu.memory_space<vmem>>, vector<1x56xf32>
    %4 = vector.broadcast %1 : f32 to vector<1x56xf32>
    %5 = arith.mulf %3, %4 : vector<1x56xf32>
    %6 = vector.broadcast %2 : f32 to vector<1x56xf32>
    %7 = arith.addf %5, %6 : vector<1x56xf32>
    %c0_3 = arith.constant 0 : index
    %c0_4 = arith.constant 0 : index
    %8 = vector.load %arg4[%c0_3, %c0_4] : memref<1x56xf32, #tpu.memory_space<vmem>>, vector<1x56xf32>
    tpu.vector_store %arg4[%c0_3, %c0_4], %7 {strides = array<i32>} : memref<1x56xf32, #tpu.memory_space<vmem>>, vector<1x56xf32>,
    %c0_5 = arith.constant 0 : index
    %c0_6 = arith.constant 0 : index
    %9 = vector.load %arg2[%c0_5, %c0_6] : memref<2x56xf32, #tpu.memory_space<vmem>>, vector<2x56xf32>
    %10 = vector.broadcast %7 : vector<1x56xf32> to vector<2x56xf32>
    %11 = arith.mulf %9, %10 : vector<2x56xf32>
    %c0_7 = arith.constant 0 : index
    %c0_8 = arith.constant 0 : index
    %12 = vector.load %arg3[%c0_7, %c0_8] : memref<2x56xf32, #tpu.memory_space<vmem>>, vector<2x56xf32>
    tpu.vector_store %arg3[%c0_7, %c0_8], %11 {strides = array<i32>} : memref<2x56xf32, #tpu.memory_space<vmem>>, vector<2x56xf32>,
    return
  }
}

</mosaic_0001>

<llo_original>
// kernel: _generator1_jit.1
$region0: #{_generator1_jit.1}
  #allocation0 [shape = 'u32[]', space=smem, size = 0x4, offset = 0x4, fixed_abs, tag = 'smem constant byte address 0x4 - core index']
  #allocation1 [shape = 'u32[144,128]{1,0:T(1,128)}', space=vmem, size = 0x12000, scoped, tag = 'internal scratch']
  #allocation2 [shape = 'f32[1]{0:T(128)S(6)}', space=smem, size = 0x200, scoped, tag = 'scoped memory for _generator1_jit.1']
  %s0 = inlined_call_operand.<no memory space> [shape: f32[1], index: 0, kind: input, shape index: {}]
  %s1 = inlined_call_operand.vmem [shape: f32[1,56], index: 1, kind: input, shape index: {}]
  %s2 = inlined_call_operand.vmem [shape: f32[2,56], index: 2, kind: input, shape index: {}]
  %s3 = inlined_call_operand.hbm [shape: f32[2,56], index: 3, kind: output, shape index: {0}]
  %s4 = inlined_call_operand.hbm [shape: f32[1,56], index: 4, kind: output, shape index: {1}]
  %5 = xla_tuple %s3, %s4
  %s6 = sld [smem:[#allocation0]]
  $region30: #{_generator1_jit.1} parent=0
    _
  %s8 = ssub.s32 1, %s6
  %s9 = scalar_select 0, %s8, %s6
  %10 = sst [smem:[#allocation2]] %s0
  $region1: #{_generator1_jit.1} parent=0
    #allocation3 [shape = 'u8[1024]{0}', space=vmem, size = 0x400, scoped, tag = 'output window, operand 0, single buffered']
    #allocation4 [shape = 's32[1]{0}', space=sflag, size = 0x4, scoped, tag = 'scoped memory for _generator1_jit.1']
    #allocation5 [shape = 'u8[512]{0}', space=vmem, size = 0x400, scoped, tag = 'output window, operand 1, single buffered']
    #allocation6 [shape = 's32[1]{0}', space=sflag, size = 0x4, scoped, tag = 'scoped memory for _generator1_jit.1']
    %11 = vsyncpa [#allocation4], 0
    %12 = vsyncpa [#allocation6], 0
    // Predicated region
    $region2: #{_generator1_jit.1} parent=1 // pred_check
      _
    $region3: #{_generator1_jit.1} parent=1 // pred_check_branch
      %14 = sbr.rel (0) target = $region5
    $region4: #{_generator1_jit.1} parent=1 // pred_region
      _
    $region5: #{_generator1_jit.1} parent=1 // pred_fallthru
      _
    // Predicated region
    $region6: #{_generator1_jit.1} parent=1 // pred_check
      _
    $region7: #{_generator1_jit.1} parent=1 // pred_check_branch
      %16 = sbr.rel (0) target = $region9
    $region8: #{_generator1_jit.1} parent=1 // pred_region
      _
    $region9: #{_generator1_jit.1} parent=1 // pred_fallthru
      _
    // Predicated region
    $region10: #{_generator1_jit.1} parent=1 // pred_check
      _
    $region11: #{_generator1_jit.1} parent=1 // pred_check_branch
      %18 = sbr.rel (0) target = $region13
    $region12: #{_generator1_jit.1} parent=1 // pred_region
      _
    $region13: #{_generator1_jit.1} parent=1 // pred_fallthru
      _
    %s19 = sld [smem:[#allocation2]]
    %s20 = smul.f32 %s19, 2.0
    %s21 = ssub.f32 1.0, %s19
    %v22 = vld [vmem:[%s1] sm:$0x1]
    %v23 = vstv %s20
    %v24 = vmul.f32 %v22, %v23
    %v25 = vstv %s21
    %v26 = vadd.f32 %v24, %v25
    %vm27 = vcmask 450560
    %28 = vst.msk [vmem:[#allocation5] sm:$0x1] %vm27, %v26
    %v29 = vld [vmem:[%s2] sm:$0x3]
    %v31 = vlaneseq
    %v32 = vshrl.u32 %v31, 7
    %v33 = vsub.s32 0, %v32
    %v34 = vrot.slane %v26, %v33
    %v36 = vmul.f32 %v29, %v34
    %vm37 = vcmask 451584
    %38 = vst.msk [vmem:[#allocation3] sm:$0x3] %vm37, %v36
    // Predicated region
    $region14: #{_generator1_jit.1} parent=1 // pred_check
      _
    $region15: #{_generator1_jit.1} parent=1 // pred_check_branch
      %40 = sbr.rel (0) target = $region17
    $region16: #{_generator1_jit.1} parent=1 // pred_region
      %s42 = ssub.s32 32, 32
      %43 = vsyncadd [#allocation4], %s42
      %s45 = sshll.u32 [#allocation3], 4
      %s46 = int_to_ptr.vmem [resolvable:$true] %s45
      %48 = dma.vmem_to_hbm [thread:$0]  %s46, 32, %s3, [#allocation4]
    $region17: #{_generator1_jit.1} parent=1 // pred_fallthru
      _
    // Predicated region
    $region18: #{_generator1_jit.1} parent=1 // pred_check
      _
    $region19: #{_generator1_jit.1} parent=1 // pred_check_branch
      %50 = sbr.rel (0) target = $region21
    $region20: #{_generator1_jit.1} parent=1 // pred_region
      %s52 = ssub.s32 16, 16
      %53 = vsyncadd [#allocation6], %s52
      %s55 = sshll.u32 [#allocation5], 4
      %s56 = int_to_ptr.vmem [resolvable:$true] %s55
      %58 = dma.vmem_to_hbm [thread:$0]  %s56, 16, %s4, [#allocation6]
    $region21: #{_generator1_jit.1} parent=1 // pred_fallthru
      _
    // Predicated region
    $region22: #{_generator1_jit.1} parent=1 // pred_check
      _
    $region23: #{_generator1_jit.1} parent=1 // pred_check_branch
      %60 = sbr.rel (0) target = $region25
    $region24: #{_generator1_jit.1} parent=1 // pred_region
      %61 = dma.done [#allocation4], 32
    $region25: #{_generator1_jit.1} parent=1 // pred_fallthru
      _
    // Predicated region
    $region26: #{_generator1_jit.1} parent=1 // pred_check
      _
    $region27: #{_generator1_jit.1} parent=1 // pred_check_branch
      %63 = sbr.rel (0) target = $region29
    $region28: #{_generator1_jit.1} parent=1 // pred_region
      %64 = dma.done [#allocation6], 16
    $region29: #{_generator1_jit.1} parent=1 // pred_fallthru
      _
    %65 = vsyncpa [#allocation4], 1
    %66 = vsyncpa [#allocation6], 1

</llo_original>
